<compile_context>
chip_gen: v7x
topology: tpu7x:2x2x1
jax: 0.10.0
libtpu: 0.0.40
codegen_flags: <defaults>
</compile_context>

<pallas_src>
import functools

import jax
import jax.numpy as jnp
from jax.experimental import pallas as pl
from jax.experimental.pallas import tpu as pltpu


def _three_inputs_kernel(
    emb_ref,    # (B, L1+L2, H) f32 : [title_emb(input1) ; full_emb(input2)] along time
    x3_ref,     # (B, n_cat)    f32
    w01_ref,    # (2H, H)       bf16: stacked conv taps [W_tap0 ; W_tap1]
    bconv_ref,  # (1, H)        f32
    wlin_ref,   # (1, H)        f32 : lin_res weight as a row
    blin_ref,   # (1, 1)        f32
    wc1_ref,    # (n_cat, H)    bf16
    bc1_ref,    # (1, H)        f32
    wc2_ref,    # (H, 32)       bf16
    bc2_ref,    # (1, 32)       f32
    wc3_ref,    # (1, 32)       f32 : category_out[-1] weight as a row
    bc3_ref,    # (1, 1)        f32
    wi_ref,     # (3, 2H)       f32 : inter_dense weight, rows = [title, full, cat]
    bi_ref,     # (1, 2H)       f32
    wf_ref,     # (1, 2H)       f32 : final_dense weight as a row
    bf_ref,     # (1, 1)        f32
    out_ref,    # (B, 1)        f32
    *, L1: int, L2: int,
):
    f32 = jnp.float32
    B, Ltot, H = emb_ref.shape
    M = B * Ltot

    # ---- shared Conv1d(H, H, k=2) + ReLU + masked mean-pool, both branches fused.
    x0 = emb_ref[...].reshape(M, H)              # aligned merge of (B, Ltot) -> rows
    # t+1 tap via XLU sublane roll (shift = M-1 == -1 mod M); rows whose roll
    # wraps across a branch/batch boundary are masked out of the pools below.
    x1 = pltpu.roll(x0, shift=M - 1, axis=0)
    xc = jnp.concatenate([x0, x1], axis=-1)      # (M, 2H), lane-dense conv input
    y = jnp.dot(xc.astype(jnp.bfloat16), w01_ref[...],
                preferred_element_type=f32)      # single fused MXU matmul
    y = jnp.maximum(y + bconv_ref[...], 0.0)     # ReLU in f32
    y = y.reshape(B, Ltot, H)

    t = jax.lax.broadcasted_iota(jnp.int32, (B, Ltot, H), 1)
    title_mask = t < (L1 - 1)                                   # valid title outputs
    full_mask = jnp.logical_and(t >= L1, t < (L1 + L2 - 1))     # valid full outputs
    pooled_title = jnp.sum(jnp.where(title_mask, y, 0.0), axis=1) * (1.0 / (L1 - 1))
    pooled_full = jnp.sum(jnp.where(full_mask, y, 0.0), axis=1) * (1.0 / (L2 - 1))

    # lin_res (Linear(H, 1), shared): VPU mul + lane reduce instead of N=1 MXU op.
    wlin = wlin_ref[...]
    title = jnp.sum(pooled_title * wlin, axis=-1, keepdims=True) + blin_ref[...]
    full = jnp.sum(pooled_full * wlin, axis=-1, keepdims=True) + blin_ref[...]

    # ---- category_out MLP (bf16 MXU operands, f32 accumulation / activations).
    h = jnp.dot(x3_ref[...].astype(jnp.bfloat16), wc1_ref[...],
                preferred_element_type=f32) + bc1_ref[...]
    h = jnp.maximum(h, 0.0)
    h = jnp.dot(h.astype(jnp.bfloat16), wc2_ref[...],
                preferred_element_type=f32) + bc2_ref[...]
    h = jnp.maximum(h, 0.0)
    cat = jnp.sum(h * wc3_ref[...], axis=-1, keepdims=True) + bc3_ref[...]   # (B, 1)

    # ---- inter_dense on [title, full, cat]: three rank-1 VPU FMAs (no concat,
    #      no K=3 matmul); final_dense as a lane reduction (no N=1 matmul).
    inter = (title * wi_ref[0:1, :] + full * wi_ref[1:2, :]
             + cat * wi_ref[2:3, :] + bi_ref[...])                           # (B, 2H)
    out = jnp.sum(inter * wf_ref[...], axis=-1, keepdims=True) + bf_ref[...]
    out_ref[...] = out.astype(out_ref.dtype)


def three_inputs_net(params, input1, input2, input3):
    B, L1 = input1.shape
    L2 = input2.shape[1]
    assert L1 >= 2 and L2 >= 2, "Conv1d(kernel_size=2) needs sequence length >= 2"

    # Embedding gathers stay in plain-JAX glue; both branches concatenated along
    # time so the kernel processes them through one conv matmul.
    emb1 = jnp.take(params["title_emb"], input1, axis=0)
    emb2 = jnp.take(params["full_emb"], input2, axis=0)
    emb_all = jnp.concatenate([emb1, emb2], axis=1).astype(jnp.float32)  # (B, L1+L2, H)

    bf16 = jnp.bfloat16
    # Stack the two conv taps into one (2H, H) weight (single fused matmul).
    # NOTE: from a real PyTorch Conv1d, conv_w0 = weight[:, :, 0].T and
    #       conv_w1 = weight[:, :, 1].T (tap order / transpose matter!).
    w01 = jnp.concatenate([params["conv_w0"], params["conv_w1"]], axis=0).astype(bf16)

    args = (
        emb_all, input3.astype(jnp.float32),
        w01, params["conv_b"],
        params["lin_res_w"].T, params["lin_res_b"],      # (1, H), (1, 1)
        params["cat_w1"].astype(bf16), params["cat_b1"],
        params["cat_w2"].astype(bf16), params["cat_b2"],
        params["cat_w3"].T, params["cat_b3"],            # (1, 32), (1, 1)
        params["inter_w"], params["inter_b"],
        params["final_w"].T, params["final_b"],          # (1, 2H), (1, 1)
    )

    H = params["title_emb"].shape[1]
    Ltot = L1 + L2
    flops = 2 * B * Ltot * (2 * H) * H                        # fused conv matmul
    flops += 2 * B * input3.shape[1] * H + 2 * B * H * 32     # category MLP matmuls
    bytes_accessed = sum(int(a.size) * a.dtype.itemsize for a in args) + B * 4

    kernel = functools.partial(_three_inputs_kernel, L1=L1, L2=L2)
    return pl.pallas_call(
        kernel,
        out_shape=jax.ShapeDtypeStruct((B, 1), jnp.float32),
        in_specs=[pl.BlockSpec(memory_space=pltpu.MemorySpace.VMEM) for _ in args],
        out_specs=pl.BlockSpec(memory_space=pltpu.MemorySpace.VMEM),
        cost_estimate=pl.CostEstimate(flops=flops, transcendentals=0,
                                      bytes_accessed=bytes_accessed),
    )(*args)


def reference_forward(params, input1, input2, input3):
    """Pure-f32 JAX reference mirroring the PyTorch forward semantics."""
    emb1 = jnp.take(params["title_emb"], input1, axis=0)
    emb2 = jnp.take(params["full_emb"], input2, axis=0)

    def branch(emb):
        x0, x1 = emb[:, :-1, :], emb[:, 1:, :]
        y = (jnp.einsum("blc,co->blo", x0, params["conv_w0"])
             + jnp.einsum("blc,co->blo", x1, params["conv_w1"])
             + params["conv_b"])
        y = jax.nn.relu(y)
        pooled = jnp.mean(y, axis=1)
        return pooled @ params["lin_res_w"] + params["lin_res_b"]

    title = branch(emb1)
    full = branch(emb2)
    h = jax.nn.relu(input3 @ params["cat_w1"] + params["cat_b1"])
    h = jax.nn.relu(h @ params["cat_w2"] + params["cat_b2"])
    cat = h @ params["cat_w3"] + params["cat_b3"]
    concat = jnp.concatenate([title, full, cat], axis=1)
    inter = concat @ params["inter_w"] + params["inter_b"]
    return inter @ params["final_w"] + params["final_b"]


def init_params(key, n_tokens, n_cat_features, concat_number_of_features, hid_size):
    """Deterministic synthetic parameters (shapes match the nn.Module)."""
    ks = jax.random.split(key, 16)

    def w(k, shape, scale=0.1):
        return (scale * jax.random.normal(k, shape)).astype(jnp.float32)

    H = hid_size
    return {
        "title_emb": w(ks[0], (n_tokens, H)),
        "full_emb": w(ks[1], (n_tokens, H)),
        # Conv1d(H, H, 2): weight (out, in, 2) split into two (in, out) matmuls.
        "conv_w0": w(ks[2], (H, H)),
        "conv_w1": w(ks[3], (H, H)),
        "conv_b": w(ks[4], (1, H)),
        "lin_res_w": w(ks[5], (H, 1)),
        "lin_res_b": w(ks[6], (1, 1)),
        "cat_w1": w(ks[7], (n_cat_features, H)),
        "cat_b1": w(ks[8], (1, H)),
        "cat_w2": w(ks[9], (H, 32)),
        "cat_b2": w(ks[10], (1, 32)),
        "cat_w3": w(ks[11], (32, 1)),
        "cat_b3": w(ks[12], (1, 1)),
        "inter_w": w(ks[13], (concat_number_of_features, 2 * H)),
        "inter_b": w(ks[14], (1, 2 * H)),
        "final_w": w(ks[15], (2 * H, 1)),
        "final_b": jnp.zeros((1, 1), jnp.float32),
    }


if __name__ == "__main__":
    B = 2            # batch
    L1, L2 = 8, 16   # title / full sequence lengths (multiples of 8 keep tiles aligned)
    H = 32           # hid_size
    N_TOKENS = 50
    N_CAT = 4
    CONCAT_FEATURES = 3   # title (B,1) + full (B,1) + category (B,1)

    key = jax.random.PRNGKey(0)
    k_params, k_i1, k_i2, k_i3 = jax.random.split(key, 4)

    params = init_params(k_params, N_TOKENS, N_CAT, CONCAT_FEATURES, H)

    input1 = jax.random.randint(k_i1, (B, L1), 0, N_TOKENS, dtype=jnp.int32)
    input2 = jax.random.randint(k_i2, (B, L2), 0, N_TOKENS, dtype=jnp.int32)
    input3 = jax.random.normal(k_i3, (B, N_CAT), dtype=jnp.float32)

    fwd = jax.jit(three_inputs_net)
    out = jax.block_until_ready(fwd(params, input1, input2, input3))
    ref = jax.block_until_ready(reference_forward(params, input1, input2, input3))

    assert out.shape == (B, 1), out.shape
    # bf16 MXU operands with f32 accumulation vs. the pure-f32 reference.
    assert jnp.allclose(out, ref, atol=5e-3, rtol=5e-3), (out, ref)
    print("KERNEL_OK")
</pallas_src>

<mosaic_0001>
module attributes {stable_mosaic.version = 11 : i64} {
  func.func @_three_inputs_kernel(%arg0: memref<2x24x32xf32, #tpu.memory_space<vmem>>, %arg1: memref<2x4xf32, #tpu.memory_space<vmem>>, %arg2: memref<64x32xbf16, #tpu.memory_space<vmem>>, %arg3: memref<1x32xf32, #tpu.memory_space<vmem>>, %arg4: memref<1x32xf32, #tpu.memory_space<vmem>>, %arg5: memref<1x1xf32, #tpu.memory_space<vmem>>, %arg6: memref<4x32xbf16, #tpu.memory_space<vmem>>, %arg7: memref<1x32xf32, #tpu.memory_space<vmem>>, %arg8: memref<32x32xbf16, #tpu.memory_space<vmem>>, %arg9: memref<1x32xf32, #tpu.memory_space<vmem>>, %arg10: memref<1x32xf32, #tpu.memory_space<vmem>>, %arg11: memref<1x1xf32, #tpu.memory_space<vmem>>, %arg12: memref<3x64xf32, #tpu.memory_space<vmem>>, %arg13: memref<1x64xf32, #tpu.memory_space<vmem>>, %arg14: memref<1x64xf32, #tpu.memory_space<vmem>>, %arg15: memref<1x1xf32, #tpu.memory_space<vmem>>, %arg16: memref<2x1xf32, #tpu.memory_space<vmem>>) attributes {dimension_semantics = [], scalar_prefetch = 0 : i64, scratch_operands = 0 : i64, tpu.core_type = #tpu.core_type<tc>} {
    %c0 = arith.constant 0 : index
    %c0_0 = arith.constant 0 : index
    %c0_1 = arith.constant 0 : index
    %0 = vector.load %arg0[%c0, %c0_0, %c0_1] : memref<2x24x32xf32, #tpu.memory_space<vmem>>, vector<2x24x32xf32>
    %1 = vector.shape_cast %0 : vector<2x24x32xf32> to vector<48x32xf32>
    %c47_i32 = arith.constant 47 : i32
    %2 = tpu.dynamic_rotate %1 by %c47_i32 dim 0 : vector<48x32xf32>, i32 -> vector<48x32xf32>
    %3 = tpu.concatenate %1, %2 in 1 : vector<48x32xf32>, vector<48x32xf32> -> vector<48x64xf32>
    %4 = arith.truncf %3 : vector<48x64xf32> to vector<48x64xbf16>
    %c0_2 = arith.constant 0 : index
    %c0_3 = arith.constant 0 : index
    %5 = vector.load %arg2[%c0_2, %c0_3] : memref<64x32xbf16, #tpu.memory_space<vmem>>, vector<64x32xbf16>
    %cst = arith.constant dense<0.000000e+00> : vector<48x32xf32>
    %6 = tpu.matmul %4, %5, %cst {dimension_numbers = #tpu.dot_dimension_numbers<[1], [0], [0], [1], [0, 0, 1, 1], [], []>} : vector<48x64xbf16>, vector<64x32xbf16>, vector<48x32xf32> -> vector<48x32xf32>
    %c0_4 = arith.constant 0 : index
    %c0_5 = arith.constant 0 : index
    %7 = vector.load %arg3[%c0_4, %c0_5] : memref<1x32xf32, #tpu.memory_space<vmem>>, vector<1x32xf32>
    %8 = vector.broadcast %7 : vector<1x32xf32> to vector<48x32xf32>
    %9 = arith.addf %6, %8 : vector<48x32xf32>
    %cst_6 = arith.constant 0.000000e+00 : f32
    %10 = vector.broadcast %cst_6 : f32 to vector<48x32xf32>
    %11 = arith.maximumf %9, %10 : vector<48x32xf32>
    %12 = vector.shape_cast %11 : vector<48x32xf32> to vector<2x24x32xf32>
    %13 = tpu.iota {dimensions = array<i32: 1>} : vector<2x24x32xi32>
    %c7_i32 = arith.constant 7 : i32
    %14 = vector.broadcast %c7_i32 : i32 to vector<2x24x32xi32>
    %15 = arith.cmpi slt, %13, %14 : vector<2x24x32xi32>
    %c8_i32 = arith.constant 8 : i32
    %16 = vector.broadcast %c8_i32 : i32 to vector<2x24x32xi32>
    %17 = arith.cmpi sge, %13, %16 : vector<2x24x32xi32>
    %c23_i32 = arith.constant 23 : i32
    %18 = vector.broadcast %c23_i32 : i32 to vector<2x24x32xi32>
    %19 = arith.cmpi slt, %13, %18 : vector<2x24x32xi32>
    %20 = arith.andi %17, %19 : vector<2x24x32xi1>
    %cst_7 = arith.constant 0.000000e+00 : f32
    %21 = vector.broadcast %cst_7 : f32 to vector<2x24x32xf32>
    %22 = arith.select %15, %12, %21 : vector<2x24x32xi1>, vector<2x24x32xf32>
    %cst_8 = arith.constant dense<0.000000e+00> : vector<2x32xf32>
    %23 = vector.multi_reduction <add>, %22, %cst_8 [1] : vector<2x24x32xf32> to vector<2x32xf32>
    %cst_9 = arith.constant 0.142857149 : f32
    %24 = vector.broadcast %cst_9 : f32 to vector<2x32xf32>
    %25 = arith.mulf %23, %24 : vector<2x32xf32>
    %cst_10 = arith.constant 0.000000e+00 : f32
    %26 = vector.broadcast %cst_10 : f32 to vector<2x24x32xf32>
    %27 = arith.select %20, %12, %26 : vector<2x24x32xi1>, vector<2x24x32xf32>
    %cst_11 = arith.constant dense<0.000000e+00> : vector<2x32xf32>
    %28 = vector.multi_reduction <add>, %27, %cst_11 [1] : vector<2x24x32xf32> to vector<2x32xf32>
    %cst_12 = arith.constant 0.0666666701 : f32
    %29 = vector.broadcast %cst_12 : f32 to vector<2x32xf32>
    %30 = arith.mulf %28, %29 : vector<2x32xf32>
    %c0_13 = arith.constant 0 : index
    %c0_14 = arith.constant 0 : index
    %31 = vector.load %arg4[%c0_13, %c0_14] : memref<1x32xf32, #tpu.memory_space<vmem>>, vector<1x32xf32>
    %32 = vector.broadcast %31 : vector<1x32xf32> to vector<2x32xf32>
    %33 = arith.mulf %25, %32 : vector<2x32xf32>
    %cst_15 = arith.constant dense<0.000000e+00> : vector<2xf32>
    %34 = vector.multi_reduction <add>, %33, %cst_15 [1] : vector<2x32xf32> to vector<2xf32>
    %35 = vector.shape_cast %34 : vector<2xf32> to vector<2x1xf32>
    %c0_16 = arith.constant 0 : index
    %c0_17 = arith.constant 0 : index
    %36 = vector.load %arg5[%c0_16, %c0_17] : memref<1x1xf32, #tpu.memory_space<vmem>>, vector<1x1xf32>
    %37 = vector.broadcast %36 : vector<1x1xf32> to vector<2x1xf32>
    %38 = arith.addf %35, %37 : vector<2x1xf32>
    %39 = vector.broadcast %31 : vector<1x32xf32> to vector<2x32xf32>
    %40 = arith.mulf %30, %39 : vector<2x32xf32>
    %cst_18 = arith.constant dense<0.000000e+00> : vector<2xf32>
    %41 = vector.multi_reduction <add>, %40, %cst_18 [1] : vector<2x32xf32> to vector<2xf32>
    %42 = vector.shape_cast %41 : vector<2xf32> to vector<2x1xf32>
    %c0_19 = arith.constant 0 : index
    %c0_20 = arith.constant 0 : index
    %43 = vector.load %arg5[%c0_19, %c0_20] : memref<1x1xf32, #tpu.memory_space<vmem>>, vector<1x1xf32>
    %44 = vector.broadcast %43 : vector<1x1xf32> to vector<2x1xf32>
    %45 = arith.addf %42, %44 : vector<2x1xf32>
    %c0_21 = arith.constant 0 : index
    %c0_22 = arith.constant 0 : index
    %46 = vector.load %arg1[%c0_21, %c0_22] : memref<2x4xf32, #tpu.memory_space<vmem>>, vector<2x4xf32>
    %47 = arith.truncf %46 : vector<2x4xf32> to vector<2x4xbf16>
    %c0_23 = arith.constant 0 : index
    %c0_24 = arith.constant 0 : index
    %48 = vector.load %arg6[%c0_23, %c0_24] : memref<4x32xbf16, #tpu.memory_space<vmem>>, vector<4x32xbf16>
    %cst_25 = arith.constant dense<0.000000e+00> : vector<2x32xf32>
    %49 = tpu.matmul %47, %48, %cst_25 {dimension_numbers = #tpu.dot_dimension_numbers<[1], [0], [0], [1], [0, 0, 1, 1], [], []>} : vector<2x4xbf16>, vector<4x32xbf16>, vector<2x32xf32> -> vector<2x32xf32>
    %c0_26 = arith.constant 0 : index
    %c0_27 = arith.constant 0 : index
    %50 = vector.load %arg7[%c0_26, %c0_27] : memref<1x32xf32, #tpu.memory_space<vmem>>, vector<1x32xf32>
    %51 = vector.broadcast %50 : vector<1x32xf32> to vector<2x32xf32>
    %52 = arith.addf %49, %51 : vector<2x32xf32>
    %cst_28 = arith.constant 0.000000e+00 : f32
    %53 = vector.broadcast %cst_28 : f32 to vector<2x32xf32>
    %54 = arith.maximumf %52, %53 : vector<2x32xf32>
    %55 = arith.truncf %54 : vector<2x32xf32> to vector<2x32xbf16>
    %c0_29 = arith.constant 0 : index
    %c0_30 = arith.constant 0 : index
    %56 = vector.load %arg8[%c0_29, %c0_30] : memref<32x32xbf16, #tpu.memory_space<vmem>>, vector<32x32xbf16>
    %cst_31 = arith.constant dense<0.000000e+00> : vector<2x32xf32>
    %57 = tpu.matmul %55, %56, %cst_31 {dimension_numbers = #tpu.dot_dimension_numbers<[1], [0], [0], [1], [0, 0, 1, 1], [], []>} : vector<2x32xbf16>, vector<32x32xbf16>, vector<2x32xf32> -> vector<2x32xf32>
    %c0_32 = arith.constant 0 : index
    %c0_33 = arith.constant 0 : index
    %58 = vector.load %arg9[%c0_32, %c0_33] : memref<1x32xf32, #tpu.memory_space<vmem>>, vector<1x32xf32>
    %59 = vector.broadcast %58 : vector<1x32xf32> to vector<2x32xf32>
    %60 = arith.addf %57, %59 : vector<2x32xf32>
    %cst_34 = arith.constant 0.000000e+00 : f32
    %61 = vector.broadcast %cst_34 : f32 to vector<2x32xf32>
    %62 = arith.maximumf %60, %61 : vector<2x32xf32>
    %c0_35 = arith.constant 0 : index
    %c0_36 = arith.constant 0 : index
    %63 = vector.load %arg10[%c0_35, %c0_36] : memref<1x32xf32, #tpu.memory_space<vmem>>, vector<1x32xf32>
    %64 = vector.broadcast %63 : vector<1x32xf32> to vector<2x32xf32>
    %65 = arith.mulf %62, %64 : vector<2x32xf32>
    %cst_37 = arith.constant dense<0.000000e+00> : vector<2xf32>
    %66 = vector.multi_reduction <add>, %65, %cst_37 [1] : vector<2x32xf32> to vector<2xf32>
    %67 = vector.shape_cast %66 : vector<2xf32> to vector<2x1xf32>
    %c0_38 = arith.constant 0 : index
    %c0_39 = arith.constant 0 : index
    %68 = vector.load %arg11[%c0_38, %c0_39] : memref<1x1xf32, #tpu.memory_space<vmem>>, vector<1x1xf32>
    %69 = vector.broadcast %68 : vector<1x1xf32> to vector<2x1xf32>
    %70 = arith.addf %67, %69 : vector<2x1xf32>
    %c0_40 = arith.constant 0 : index
    %c0_41 = arith.constant 0 : index
    %71 = vector.load %arg12[%c0_40, %c0_41] : memref<3x64xf32, #tpu.memory_space<vmem>>, vector<1x64xf32>
    %72 = vector.broadcast %38 : vector<2x1xf32> to vector<2x64xf32>
    %73 = vector.broadcast %71 : vector<1x64xf32> to vector<2x64xf32>
    %74 = arith.mulf %72, %73 : vector<2x64xf32>
    %c1 = arith.constant 1 : index
    %c0_42 = arith.constant 0 : index
    %75 = vector.load %arg12[%c1, %c0_42] : memref<3x64xf32, #tpu.memory_space<vmem>>, vector<1x64xf32>
    %76 = vector.broadcast %45 : vector<2x1xf32> to vector<2x64xf32>
    %77 = vector.broadcast %75 : vector<1x64xf32> to vector<2x64xf32>
    %78 = arith.mulf %76, %77 : vector<2x64xf32>
    %79 = arith.addf %74, %78 : vector<2x64xf32>
    %c2 = arith.constant 2 : index
    %c0_43 = arith.constant 0 : index
    %80 = vector.load %arg12[%c2, %c0_43] : memref<3x64xf32, #tpu.memory_space<vmem>>, vector<1x64xf32>
    %81 = vector.broadcast %70 : vector<2x1xf32> to vector<2x64xf32>
    %82 = vector.broadcast %80 : vector<1x64xf32> to vector<2x64xf32>
    %83 = arith.mulf %81, %82 : vector<2x64xf32>
    %84 = arith.addf %79, %83 : vector<2x64xf32>
    %c0_44 = arith.constant 0 : index
    %c0_45 = arith.constant 0 : index
    %85 = vector.load %arg13[%c0_44, %c0_45] : memref<1x64xf32, #tpu.memory_space<vmem>>, vector<1x64xf32>
    %86 = vector.broadcast %85 : vector<1x64xf32> to vector<2x64xf32>
    %87 = arith.addf %84, %86 : vector<2x64xf32>
    %c0_46 = arith.constant 0 : index
    %c0_47 = arith.constant 0 : index
    %88 = vector.load %arg14[%c0_46, %c0_47] : memref<1x64xf32, #tpu.memory_space<vmem>>, vector<1x64xf32>
    %89 = vector.broadcast %88 : vector<1x64xf32> to vector<2x64xf32>
    %90 = arith.mulf %87, %89 : vector<2x64xf32>
    %cst_48 = arith.constant dense<0.000000e+00> : vector<2xf32>
    %91 = vector.multi_reduction <add>, %90, %cst_48 [1] : vector<2x64xf32> to vector<2xf32>
    %92 = vector.shape_cast %91 : vector<2xf32> to vector<2x1xf32>
    %c0_49 = arith.constant 0 : index
    %c0_50 = arith.constant 0 : index
    %93 = vector.load %arg15[%c0_49, %c0_50] : memref<1x1xf32, #tpu.memory_space<vmem>>, vector<1x1xf32>
    %94 = vector.broadcast %93 : vector<1x1xf32> to vector<2x1xf32>
    %95 = arith.addf %92, %94 : vector<2x1xf32>
    %c0_51 = arith.constant 0 : index
    %c0_52 = arith.constant 0 : index
    %96 = vector.load %arg16[%c0_51, %c0_52] : memref<2x1xf32, #tpu.memory_space<vmem>>, vector<2x1xf32>
    tpu.vector_store %arg16[%c0_51, %c0_52], %95 {strides = array<i32>} : memref<2x1xf32, #tpu.memory_space<vmem>>, vector<2x1xf32>,
    return
  }
}

</mosaic_0001>

<llo_original>
// kernel: three_inputs_net.1
$region0: #{three_inputs_net.1}
  #allocation0 [shape = 'u32[]', space=smem, size = 0x4, offset = 0x4, fixed_abs, tag = 'smem constant byte address 0x4 - core index']
  #allocation1 [shape = 'u32[144,128]{1,0:T(1,128)}', space=vmem, size = 0x12000, scoped, tag = 'internal scratch']
  #allocation2 [shape = 'f32[1,1]{1,0:T(1,128)S(1)}', space=vmem, size = 0x200, scoped, tag = 'scoped memory for three_inputs_net.1']
  #allocation3 [shape = 'f32[1,1]{1,0:T(1,128)S(1)}', space=vmem, size = 0x200, scoped, tag = 'scoped memory for three_inputs_net.1']
  #allocation4 [shape = 'f32[1,1]{1,0:T(1,128)S(1)}', space=vmem, size = 0x200, scoped, tag = 'scoped memory for three_inputs_net.1']
  %s0 = inlined_call_operand.vmem [shape: f32[2,24,32], index: 0, kind: input, shape index: {}]
  %s1 = inlined_call_operand.vmem [shape: f32[2,4], index: 1, kind: input, shape index: {}]
  %s2 = inlined_call_operand.vmem [shape: bf16[64,32], index: 2, kind: input, shape index: {}]
  %s3 = inlined_call_operand.vmem [shape: f32[1,32], index: 3, kind: input, shape index: {}]
  %s4 = inlined_call_operand.vmem [shape: f32[1,32], index: 4, kind: input, shape index: {}]
  %s5 = inlined_call_operand.<no memory space> [shape: f32[1,1], index: 5, kind: input, shape index: {}]
  %s6 = inlined_call_operand.vmem [shape: bf16[4,32], index: 6, kind: input, shape index: {}]
  %s7 = inlined_call_operand.vmem [shape: f32[1,32], index: 7, kind: input, shape index: {}]
  %s8 = inlined_call_operand.vmem [shape: bf16[32,32], index: 8, kind: input, shape index: {}]
  %s9 = inlined_call_operand.vmem [shape: f32[1,32], index: 9, kind: input, shape index: {}]
  %s10 = inlined_call_operand.vmem [shape: f32[1,32], index: 10, kind: input, shape index: {}]
  %s11 = inlined_call_operand.<no memory space> [shape: f32[1,1], index: 11, kind: input, shape index: {}]
  %s12 = inlined_call_operand.vmem [shape: f32[3,64], index: 12, kind: input, shape index: {}]
  %s13 = inlined_call_operand.vmem [shape: f32[1,64], index: 13, kind: input, shape index: {}]
  %s14 = inlined_call_operand.vmem [shape: f32[1,64], index: 14, kind: input, shape index: {}]
  %s15 = inlined_call_operand.<no memory space> [shape: f32[1,1], index: 15, kind: input, shape index: {}]
  %s16 = inlined_call_operand.vmem [shape: f32[2,1], index: 16, kind: output, shape index: {}]
  %s17 = sld [smem:[#allocation0]]
  $region74: #{three_inputs_net.1} parent=0
    _
  %s19 = ssub.s32 1, %s17
  %s20 = scalar_select 0, %s19, %s17
  %v21 = vstv %s5
  %22 = vst [vmem:[#allocation2] sm:$0x1] %v21
  %v23 = vstv %s11
  %24 = vst [vmem:[#allocation3] sm:$0x1] %v23
  %v25 = vstv %s15
  %26 = vst [vmem:[#allocation4] sm:$0x1] %v25
  // Predicated region
  $region2: #{three_inputs_net.1} parent=0 // pred_check
    _
  $region3: #{three_inputs_net.1} parent=0 // pred_check_branch
    %28 = sbr.rel (0) target = $region5
  $region4: #{three_inputs_net.1} parent=0 // pred_region
    _
  $region5: #{three_inputs_net.1} parent=0 // pred_fallthru
    _
  // Predicated region
  $region6: #{three_inputs_net.1} parent=0 // pred_check
    _
  $region7: #{three_inputs_net.1} parent=0 // pred_check_branch
    %30 = sbr.rel (0) target = $region9
  $region8: #{three_inputs_net.1} parent=0 // pred_region
    _
  $region9: #{three_inputs_net.1} parent=0 // pred_fallthru
    _
  // Predicated region
  $region10: #{three_inputs_net.1} parent=0 // pred_check
    _
  $region11: #{three_inputs_net.1} parent=0 // pred_check_branch
    %32 = sbr.rel (0) target = $region13
  $region12: #{three_inputs_net.1} parent=0 // pred_region
    _
  $region13: #{three_inputs_net.1} parent=0 // pred_fallthru
    _
  // Predicated region
  $region14: #{three_inputs_net.1} parent=0 // pred_check
    _
  $region15: #{three_inputs_net.1} parent=0 // pred_check_branch
    %34 = sbr.rel (0) target = $region17
  $region16: #{three_inputs_net.1} parent=0 // pred_region
    _
  $region17: #{three_inputs_net.1} parent=0 // pred_fallthru
    _
  // Predicated region
  $region18: #{three_inputs_net.1} parent=0 // pred_check
    _
  $region19: #{three_inputs_net.1} parent=0 // pred_check_branch
    %36 = sbr.rel (0) target = $region21
  $region20: #{three_inputs_net.1} parent=0 // pred_region
    _
  $region21: #{three_inputs_net.1} parent=0 // pred_fallthru
    _
  // Predicated region
  $region22: #{three_inputs_net.1} parent=0 // pred_check
    _
  $region23: #{three_inputs_net.1} parent=0 // pred_check_branch
    %38 = sbr.rel (0) target = $region25
  $region24: #{three_inputs_net.1} parent=0 // pred_region
    _
  $region25: #{three_inputs_net.1} parent=0 // pred_fallthru
    _
  // Predicated region
  $region26: #{three_inputs_net.1} parent=0 // pred_check
    _
  $region27: #{three_inputs_net.1} parent=0 // pred_check_branch
    %40 = sbr.rel (0) target = $region29
  $region28: #{three_inputs_net.1} parent=0 // pred_region
    _
  $region29: #{three_inputs_net.1} parent=0 // pred_fallthru
    _
  // Predicated region
  $region30: #{three_inputs_net.1} parent=0 // pred_check
    _
  $region31: #{three_inputs_net.1} parent=0 // pred_check_branch
    %42 = sbr.rel (0) target = $region33
  $region32: #{three_inputs_net.1} parent=0 // pred_region
    _
  $region33: #{three_inputs_net.1} parent=0 // pred_fallthru
    _
  // Predicated region
  $region34: #{three_inputs_net.1} parent=0 // pred_check
    _
  $region35: #{three_inputs_net.1} parent=0 // pred_check_branch
    %44 = sbr.rel (0) target = $region37
  $region36: #{three_inputs_net.1} parent=0 // pred_region
    _
  $region37: #{three_inputs_net.1} parent=0 // pred_fallthru
    _
  // Predicated region
  $region38: #{three_inputs_net.1} parent=0 // pred_check
    _
  $region39: #{three_inputs_net.1} parent=0 // pred_check_branch
    %46 = sbr.rel (0) target = $region41
  $region40: #{three_inputs_net.1} parent=0 // pred_region
    _
  $region41: #{three_inputs_net.1} parent=0 // pred_fallthru
    _
  // Predicated region
  $region42: #{three_inputs_net.1} parent=0 // pred_check
    _
  $region43: #{three_inputs_net.1} parent=0 // pred_check_branch
    %48 = sbr.rel (0) target = $region45
  $region44: #{three_inputs_net.1} parent=0 // pred_region
    _
  $region45: #{three_inputs_net.1} parent=0 // pred_fallthru
    _
  // Predicated region
  $region46: #{three_inputs_net.1} parent=0 // pred_check
    _
  $region47: #{three_inputs_net.1} parent=0 // pred_check_branch
    %50 = sbr.rel (0) target = $region49
  $region48: #{three_inputs_net.1} parent=0 // pred_region
    _
  $region49: #{three_inputs_net.1} parent=0 // pred_fallthru
    _
  // Predicated region
  $region50: #{three_inputs_net.1} parent=0 // pred_check
    _
  $region51: #{three_inputs_net.1} parent=0 // pred_check_branch
    %52 = sbr.rel (0) target = $region53
  $region52: #{three_inputs_net.1} parent=0 // pred_region
    _
  $region53: #{three_inputs_net.1} parent=0 // pred_fallthru
    _
  // Predicated region
  $region54: #{three_inputs_net.1} parent=0 // pred_check
    _
  $region55: #{three_inputs_net.1} parent=0 // pred_check_branch
    %54 = sbr.rel (0) target = $region57
  $region56: #{three_inputs_net.1} parent=0 // pred_region
    _
  $region57: #{three_inputs_net.1} parent=0 // pred_fallthru
    _
  // Predicated region
  $region58: #{three_inputs_net.1} parent=0 // pred_check
    _
  $region59: #{three_inputs_net.1} parent=0 // pred_check_branch
    %56 = sbr.rel (0) target = $region61
  $region60: #{three_inputs_net.1} parent=0 // pred_region
    _
  $region61: #{three_inputs_net.1} parent=0 // pred_fallthru
    _
  // Predicated region
  $region62: #{three_inputs_net.1} parent=0 // pred_check
    _
  $region63: #{three_inputs_net.1} parent=0 // pred_check_branch
    %58 = sbr.rel (0) target = $region65
  $region64: #{three_inputs_net.1} parent=0 // pred_region
    _
  $region65: #{three_inputs_net.1} parent=0 // pred_fallthru
    _
  %v60 = vld [vmem:[%s0] sm:$0xff]
  %v61 = vld [vmem:[%s0 + $0x8] sm:$0xff]
  %v62 = vld [vmem:[%s0 + $0x10] sm:$0xff]
  %v63 = vld [vmem:[%s0 + $0x18] sm:$0xff]
  %v64 = vld [vmem:[%s0 + $0x20] sm:$0xff]
  %v65 = vld [vmem:[%s0 + $0x28] sm:$0xff]
  %v66 = vrot.slane %v60, 1
  %v67 = vrot.slane %v61, 1
  %v68 = vrot.slane %v62, 1
  %v69 = vrot.slane %v63, 1
  %v70 = vrot.slane %v64, 1
  %v71 = vrot.slane %v65, 1
  %v72 = vlaneseq
  %v73 = vshrl.u32 %v72, 7
  %vm74 = vcmp.lt.s32.totalorder %v73, 7
  %v75 = vsel %vm74, %v70, %v71
  %v76 = vsel %vm74, %v69, %v70
  %v77 = vsel %vm74, %v68, %v69
  %v78 = vsel %vm74, %v67, %v68
  %v79 = vsel %vm74, %v66, %v67
  %v80 = vsel %vm74, %v71, %v66
  %87 = vrot.lane.b32.xlu0 %v79, 32
  %v88 = vpop.permute.xlu0 %87
  %89 = vrot.lane.b32.xlu0 %v78, 32
  %v90 = vpop.permute.xlu0 %89
  %91 = vrot.lane.b32.xlu0 %v77, 32
  %v92 = vpop.permute.xlu0 %91
  %93 = vrot.lane.b32.xlu0 %v76, 32
  %v94 = vpop.permute.xlu0 %93
  %95 = vrot.lane.b32.xlu0 %v75, 32
  %v96 = vpop.permute.xlu0 %95
  %97 = vrot.lane.b32.xlu0 %v80, 32
  %v98 = vpop.permute.xlu0 %97
  %vm105 = vcmask 261120
  %v106 = vsel %vm105, %v60, %v88
  %v107 = vsel %vm105, %v61, %v90
  %v108 = vsel %vm105, %v62, %v92
  %v109 = vsel %vm105, %v63, %v94
  %v110 = vsel %vm105, %v64, %v96
  %v111 = vsel %vm105, %v65, %v98
  %v112 = vpack.c.bf16 %v107, %v106
  %v113 = vpack.c.bf16 %v109, %v108
  %v114 = vpack.c.bf16 %v111, %v110
  %v115 = vld [vmem:[%s2] sm:$0xf]
  %v116 = vld [vmem:[%s2 + $0x4] sm:$0xf]
  %v117 = vld [vmem:[%s2 + $0x8] sm:$0xf]
  %v118 = vld [vmem:[%s2 + $0xc] sm:$0xf]
  %v119 = vld [vmem:[%s2 + $0x10] sm:$0xf]
  %v120 = vld [vmem:[%s2 + $0x14] sm:$0xf]
  %v121 = vld [vmem:[%s2 + $0x18] sm:$0xf]
  %v122 = vld [vmem:[%s2 + $0x1c] sm:$0xf]
  %v123 = vld [vmem:[%s3] sm:$0x1]
  %v125 = vlaneseq
  %v126 = vshrl.u32 %v125, 7
  %v127 = vsub.s32 0, %v126
  %v128 = vrot.slane %v123, %v127
  %v138 = vunpack.c.l.b16 %v115
  %v139 = vunpack.c.l.b16 %v116
  %v140 = vunpack.c.l.b16 %v117
  %v141 = vunpack.c.l.b16 %v118
  %v142 = vunpack.c.l.b16 %v119
  %v143 = vunpack.c.l.b16 %v120
  %v144 = vunpack.c.l.b16 %v121
  %v145 = vunpack.c.l.b16 %v122
  %v146 = vpack.c.b16 %v139, %v138
  %v147 = vpack.c.b16 %v141, %v140
  %v148 = vpack.c.b16 %v143, %v142
  %v149 = vpack.c.b16 %v145, %v144
  %vm154 = vcmask 523264
  %v156 = vsel %vm154, %v112, 0
  %v159 = vsel %vm154, %v113, 0
  %v162 = vsel %vm154, %v114, 0
  %164 = vmatprep.subr.bf16.mxu0 0
  %165 = vmatpush1.bf16.msra.mxu0 %v146
  %166 = vmatprep.subr.bf16.mxu0 0
  %167 = vmatpush1.bf16.msra.mxu0 %v147
  %168 = vmatprep.subr.bf16.mxu0 0
  %169 = vmatpush1.bf16.msra.mxu0 %v148
  %170 = vmatprep.subr.bf16.mxu0 0
  %171 = vmatpush1.bf16.msra.mxu0 %v149
  %172 = vmatprep.subr.bf16.mxu0 0
  %173 = vmatpush1.bf16.msra.mxu0 0
  %174 = vmatprep.subr.bf16.mxu0 0
  %175 = vmatpush1.bf16.msra.mxu0 0
  %176 = vmatprep.subr.bf16.mxu0 0
  %177 = vmatpush1.bf16.msra.mxu0 0
  %178 = vmatprep.subr.bf16.mxu0 0
  %179 = vmatpush1.bf16.msra.mxu0 0
  %180 = vmatprep.subr.bf16.mxu0 0
  %181 = vmatpush1.bf16.msra.mxu0 0
  %182 = vmatprep.subr.bf16.mxu0 0
  %183 = vmatpush1.bf16.msra.mxu0 0
  %184 = vmatprep.subr.bf16.mxu0 0
  %185 = vmatpush1.bf16.msra.mxu0 0
  %186 = vmatprep.subr.bf16.mxu0 0
  %187 = vmatpush1.bf16.msra.mxu0 0
  %188 = vmatprep.subr.bf16.mxu0 0
  %189 = vmatpush1.bf16.msra.mxu0 0
  %190 = vmatprep.subr.bf16.mxu0 0
  %191 = vmatpush1.bf16.msra.mxu0 0
  %192 = vmatprep.subr.bf16.mxu0 0
  %193 = vmatpush1.bf16.msra.mxu0 0
  %194 = vmatprep.subr.bf16.mxu0 0
  %195 = vmatpush1.bf16.msra.mxu0 0
  %196 = vmatprep.mubr.bf16.mxu0 0
  %197 = vmatmul.mubr.bf16.gmra.mrb[0].mxu0 %v156
  %v198 = vpop.f32.mrb[0].mxu0
  %v199 = vadd.f32 %v128, %v198
  %v200 = vpop.f32.mrb[0].mxu0
  %v201 = vpop.f32.mrb[0].mxu0
  %v202 = vadd.f32 %v128, %v201
  %v203 = vpop.f32.mrb[0].mxu0
  %204 = vmatprep.mubr.bf16.mxu0 0
  %205 = vmatmul.mubr.bf16.gmra.mrb[0].mxu0 %v159
  %v206 = vpop.f32.mrb[0].mxu0
  %v207 = vadd.f32 %v128, %v206
  %v208 = vpop.f32.mrb[0].mxu0
  %v209 = vpop.f32.mrb[0].mxu0
  %v210 = vadd.f32 %v128, %v209
  %v211 = vpop.f32.mrb[0].mxu0
  %212 = vmatprep.mubr.bf16.mxu0 0
  %213 = vmatmul.mubr.bf16.gmra.mrb[0].mxu0 %v162
  %v214 = vpop.f32.mrb[0].mxu0
  %v215 = vadd.f32 %v128, %v214
  %v216 = vpop.f32.mrb[0].mxu0
  %v217 = vpop.f32.mrb[0].mxu0
  %v218 = vadd.f32 %v128, %v217
  %v219 = vpop.f32.mrb[0].mxu0
  %220 = vdwg.mxu0
  %v221 = vmax.f32 %v199, 0.0
  %v222 = vmax.f32 %v202, 0.0
  %v223 = vmax.f32 %v207, 0.0
  %v224 = vmax.f32 %v210, 0.0
  %v225 = vmax.f32 %v215, 0.0
  %v226 = vmax.f32 %v218, 0.0
  %v227 = vadd.s32 %v73, 8
  %v228 = vadd.s32 %v73, 16
  %vm229 = vcmp.lt.s32.totalorder %v227, 7
  %vm230 = vcmp.lt.s32.totalorder %v228, 7
  %vm231 = vcmp.ge.s32.totalorder %v73, 8
  %vm232 = vcmp.ge.s32.totalorder %v227, 8
  %vm233 = vcmp.ge.s32.totalorder %v228, 8
  %vm234 = vcmp.lt.s32.totalorder %v73, 23
  %vm235 = vcmp.lt.s32.totalorder %v227, 23
  %vm236 = vcmp.lt.s32.totalorder %v228, 23
  %vm237 = vmand %vm231, %vm234
  %vm238 = vmand %vm232, %vm235
  %vm239 = vmand %vm233, %vm236
  %v240 = vsel %vm74, %v221, 0.0
  %v241 = vsel %vm229, %v222, 0.0
  %v242 = vsel %vm230, %v223, 0.0
  %v243 = vsel %vm74, %v224, 0.0
  %v244 = vsel %vm229, %v225, 0.0
  %v245 = vsel %vm230, %v226, 0.0
  %v246 = vsel %vm105, %v240, 0.0
  %v247 = vsel %vm105, %v241, 0.0
  %v248 = vadd.f32 %v246, %v247
  %v249 = vsel %vm105, %v242, 0.0
  %v250 = vadd.f32 %v248, %v249
  %v251 = vrot.slane %v250, 4
  %v252 = vadd.f32 %v250, %v251
  %v253 = vrot.slane %v252, 2
  %v254 = vadd.f32 %v252, %v253
  %v255 = vrot.slane %v254, 1
  %v256 = vadd.f32 %v254, %v255
  %v257 = vsel %vm105, %v243, 0.0
  %v258 = vsel %vm105, %v244, 0.0
  %v259 = vadd.f32 %v257, %v258
  %v260 = vsel %vm105, %v245, 0.0
  %v261 = vadd.f32 %v259, %v260
  %v262 = vrot.slane %v261, 4
  %v263 = vadd.f32 %v261, %v262
  %v264 = vrot.slane %v263, 2
  %v265 = vadd.f32 %v263, %v264
  %v266 = vrot.slane %v265, 1
  %v267 = vadd.f32 %v265, %v266
  %v268 = vmul.f32 %v256, 0.14285715
  %v269 = vmul.f32 %v267, 0.14285715
  %v270 = vsel %vm237, %v221, 0.0
  %v271 = vsel %vm238, %v222, 0.0
  %v272 = vsel %vm239, %v223, 0.0
  %v273 = vsel %vm237, %v224, 0.0
  %v274 = vsel %vm238, %v225, 0.0
  %v275 = vsel %vm239, %v226, 0.0
  %v276 = vsel %vm105, %v270, 0.0
  %v277 = vsel %vm105, %v271, 0.0
  %v278 = vadd.f32 %v276, %v277
  %v279 = vsel %vm105, %v272, 0.0
  %v280 = vadd.f32 %v278, %v279
  %v281 = vrot.slane %v280, 4
  %v282 = vadd.f32 %v280, %v281
  %v283 = vrot.slane %v282, 2
  %v284 = vadd.f32 %v282, %v283
  %v285 = vrot.slane %v284, 1
  %v286 = vadd.f32 %v284, %v285
  %v287 = vsel %vm105, %v273, 0.0
  %v288 = vsel %vm105, %v274, 0.0
  %v289 = vadd.f32 %v287, %v288
  %v290 = vsel %vm105, %v275, 0.0
  %v291 = vadd.f32 %v289, %v290
  %v292 = vrot.slane %v291, 4
  %v293 = vadd.f32 %v291, %v292
  %v294 = vrot.slane %v293, 2
  %v295 = vadd.f32 %v293, %v294
  %v296 = vrot.slane %v295, 1
  %v297 = vadd.f32 %v295, %v296
  %v298 = vmul.f32 %v286, 0.06666667
  %v299 = vmul.f32 %v297, 0.06666667
  %v300 = vld [vmem:[%s4] sm:$0x1]
  %v302 = vlaneseq
  %v303 = vshrl.u32 %v302, 7
  %v304 = vsub.s32 0, %v303
  %v305 = vrot.slane %v300, %v304
  %v307 = vmul.f32 %v268, %v305
  %v308 = vmul.f32 %v269, %v305
  %v311 = vrot.slane %v308, 7
  %vm312 = vcmask 1041409
  %v313 = vsel %vm312, %v311, %v307
  %vm315 = vcmask 254976
  %v316 = vsel %vm315, %v313, 0.0
  %317 = vadd.xlane.f32.xlu0 %v316
  %v318 = vpop.xlane.xlu0 %317
  %v319 = vld [vmem:[#allocation2] sm:$0x1]
  %v321 = vlaneseq
  %v322 = vshrl.u32 %v321, 7
  %v323 = vsub.s32 0, %v322
  %v324 = vrot.slane %v319, %v323
  %v326 = vadd.f32 %v318, %v324
  %v327 = vmul.f32 %v298, %v305
  %v328 = vmul.f32 %v299, %v305
  %v331 = vrot.slane %v328, 7
  %v332 = vsel %vm312, %v331, %v327
  %v334 = vsel %vm315, %v332, 0.0
  %335 = vadd.xlane.f32.xlu0 %v334
  %v336 = vpop.xlane.xlu0 %335
  %v337 = vadd.f32 %v336, %v324
  %v338 = vld [vmem:[%s1] sm:$0x3]
  %v339 = vpack.c.bf16 %v338, %v338
  %v340 = vld [vmem:[%s6] sm:$0x3]
  %v341 = vld [vmem:[%s7] sm:$0x1]
  %v343 = vlaneseq
  %v344 = vshrl.u32 %v343, 7
  %v345 = vsub.s32 0, %v344
  %v346 = vrot.slane %v341, %v345
  %vm348 = vcmask 31744
  %v350 = vsel %vm348, %v339, 0
  %vm352 = vcmask 1041408
  %v354 = vsel %vm352, %v340, 0
  %356 = vmatprep.subr.bf16.mxu0 0
  %357 = vmatpush1.bf16.msra.mxu0 %v354
  %358 = vmatprep.subr.bf16.mxu0 0
  %359 = vmatpush1.bf16.msra.mxu0 0
  %360 = vmatprep.subr.bf16.mxu0 0
  %361 = vmatpush1.bf16.msra.mxu0 0
  %362 = vmatprep.subr.bf16.mxu0 0
  %363 = vmatpush1.bf16.msra.mxu0 0
  %364 = vmatprep.subr.bf16.mxu0 0
  %365 = vmatpush1.bf16.msra.mxu0 0
  %366 = vmatprep.subr.bf16.mxu0 0
  %367 = vmatpush1.bf16.msra.mxu0 0
  %368 = vmatprep.subr.bf16.mxu0 0
  %369 = vmatpush1.bf16.msra.mxu0 0
  %370 = vmatprep.subr.bf16.mxu0 0
  %371 = vmatpush1.bf16.msra.mxu0 0
  %372 = vmatprep.subr.bf16.mxu0 0
  %373 = vmatpush1.bf16.msra.mxu0 0
  %374 = vmatprep.subr.bf16.mxu0 0
  %375 = vmatpush1.bf16.msra.mxu0 0
  %376 = vmatprep.subr.bf16.mxu0 0
  %377 = vmatpush1.bf16.msra.mxu0 0
  %378 = vmatprep.subr.bf16.mxu0 0
  %379 = vmatpush1.bf16.msra.mxu0 0
  %380 = vmatprep.subr.bf16.mxu0 0
  %381 = vmatpush1.bf16.msra.mxu0 0
  %382 = vmatprep.subr.bf16.mxu0 0
  %383 = vmatpush1.bf16.msra.mxu0 0
  %384 = vmatprep.subr.bf16.mxu0 0
  %385 = vmatpush1.bf16.msra.mxu0 0
  %386 = vmatprep.subr.bf16.mxu0 0
  %387 = vmatpush1.bf16.msra.mxu0 0
  %388 = vmatprep.mubr.bf16.mxu0 0
  %389 = vmatmul.mubr.bf16.gmra.mrb[0].mxu0 %v350
  %v390 = vpop.f32.mrb[0].mxu0
  %v391 = vadd.f32 %v346, %v390
  %v392 = vpop.f32.mrb[0].mxu0
  %v393 = vpop.f32.mrb[0].mxu0
  %v394 = vpop.f32.mrb[0].mxu0
  %395 = vdwg.mxu0
  %v396 = vmax.f32 %v391, 0.0
  %v397 = vpack.c.bf16 %v396, %v396
  %v398 = vld [vmem:[%s8] sm:$0xf]
  %v399 = vld [vmem:[%s8 + $0x4] sm:$0xf]
  %v400 = vld [vmem:[%s8 + $0x8] sm:$0xf]
  %v401 = vld [vmem:[%s8 + $0xc] sm:$0xf]
  %v402 = vld [vmem:[%s9] sm:$0x1]
  %v404 = vlaneseq
  %v405 = vshrl.u32 %v404, 7
  %v406 = vsub.s32 0, %v405
  %v407 = vrot.slane %v402, %v406
  %v413 = vunpack.c.l.b16 %v398
  %v414 = vunpack.c.l.b16 %v399
  %v415 = vunpack.c.l.b16 %v400
  %v416 = vunpack.c.l.b16 %v401
  %v417 = vpack.c.b16 %v414, %v413
  %v418 = vpack.c.b16 %v416, %v415
  %v422 = vsel %vm105, %v397, 0
  %424 = vmatprep.subr.bf16.mxu0 0
  %425 = vmatpush1.bf16.msra.mxu0 %v417
  %426 = vmatprep.subr.bf16.mxu0 0
  %427 = vmatpush1.bf16.msra.mxu0 %v418
  %428 = vmatprep.subr.bf16.mxu0 0
  %429 = vmatpush1.bf16.msra.mxu0 0
  %430 = vmatprep.subr.bf16.mxu0 0
  %431 = vmatpush1.bf16.msra.mxu0 0
  %432 = vmatprep.subr.bf16.mxu0 0
  %433 = vmatpush1.bf16.msra.mxu0 0
  %434 = vmatprep.subr.bf16.mxu0 0
  %435 = vmatpush1.bf16.msra.mxu0 0
  %436 = vmatprep.subr.bf16.mxu0 0
  %437 = vmatpush1.bf16.msra.mxu0 0
  %438 = vmatprep.subr.bf16.mxu0 0
  %439 = vmatpush1.bf16.msra.mxu0 0
  %440 = vmatprep.subr.bf16.mxu0 0
  %441 = vmatpush1.bf16.msra.mxu0 0
  %442 = vmatprep.subr.bf16.mxu0 0
  %443 = vmatpush1.bf16.msra.mxu0 0
  %444 = vmatprep.subr.bf16.mxu0 0
  %445 = vmatpush1.bf16.msra.mxu0 0
  %446 = vmatprep.subr.bf16.mxu0 0
  %447 = vmatpush1.bf16.msra.mxu0 0
  %448 = vmatprep.subr.bf16.mxu0 0
  %449 = vmatpush1.bf16.msra.mxu0 0
  %450 = vmatprep.subr.bf16.mxu0 0
  %451 = vmatpush1.bf16.msra.mxu0 0
  %452 = vmatprep.subr.bf16.mxu0 0
  %453 = vmatpush1.bf16.msra.mxu0 0
  %454 = vmatprep.subr.bf16.mxu0 0
  %455 = vmatpush1.bf16.msra.mxu0 0
  %456 = vmatprep.mubr.bf16.mxu0 0
  %457 = vmatmul.mubr.bf16.gmra.mrb[0].mxu0 %v422
  %v458 = vpop.f32.mrb[0].mxu0
  %v459 = vadd.f32 %v407, %v458
  %v460 = vpop.f32.mrb[0].mxu0
  %v461 = vpop.f32.mrb[0].mxu0
  %v462 = vpop.f32.mrb[0].mxu0
  %463 = vdwg.mxu0
  %v464 = vmax.f32 %v459, 0.0
  %v465 = vld [vmem:[%s10] sm:$0x1]
  %v467 = vlaneseq
  %v468 = vshrl.u32 %v467, 7
  %v469 = vsub.s32 0, %v468
  %v470 = vrot.slane %v465, %v469
  %v472 = vmul.f32 %v464, %v470
  %v473 = vsel %vm315, %v472, 0.0
  %474 = vadd.xlane.f32.xlu0 %v473
  %v475 = vpop.xlane.xlu0 %474
  %v476 = vld [vmem:[#allocation3] sm:$0x1]
  %v478 = vlaneseq
  %v479 = vshrl.u32 %v478, 7
  %v480 = vsub.s32 0, %v479
  %v481 = vrot.slane %v476, %v480
  %v483 = vadd.f32 %v475, %v481
  %v484 = vld [vmem:[%s12] sm:$0x1]
  %486 = vset.pattern.permute.xlu0 0
  %487 = vperm.xlu0 %486, %v326
  %v488 = vpop.permute.xlu0 %487
  %v490 = vlaneseq
  %v491 = vshrl.u32 %v490, 7
  %v492 = vsub.s32 0, %v491
  %v493 = vrot.slane %v484, %v492
  %v494 = vmul.f32 %v488, %v493
  %v495 = vld [vmem:[%s12 + $0x1] sm:$0x1]
  %497 = vset.pattern.permute.xlu0 0
  %498 = vperm.xlu0 %497, %v337
  %v499 = vpop.permute.xlu0 %498
  %v501 = vlaneseq
  %v502 = vshrl.u32 %v501, 7
  %v503 = vsub.s32 0, %v502
  %v504 = vrot.slane %v495, %v503
  %v505 = vmul.f32 %v499, %v504
  %v506 = vadd.f32 %v494, %v505
  %v507 = vld [vmem:[%s12 + $0x2] sm:$0x1]
  %509 = vset.pattern.permute.xlu0 0
  %510 = vperm.xlu0 %509, %v483
  %v511 = vpop.permute.xlu0 %510
  %v513 = vlaneseq
  %v514 = vshrl.u32 %v513, 7
  %v515 = vsub.s32 0, %v514
  %v516 = vrot.slane %v507, %v515
  %v517 = vmul.f32 %v511, %v516
  %v518 = vadd.f32 %v506, %v517
  %v519 = vld [vmem:[%s13] sm:$0x1]
  %v521 = vlaneseq
  %v522 = vshrl.u32 %v521, 7
  %v523 = vsub.s32 0, %v522
  %v524 = vrot.slane %v519, %v523
  %v526 = vadd.f32 %v518, %v524
  %v527 = vld [vmem:[%s14] sm:$0x1]
  %v529 = vlaneseq
  %v530 = vshrl.u32 %v529, 7
  %v531 = vsub.s32 0, %v530
  %v532 = vrot.slane %v527, %v531
  %v534 = vmul.f32 %v526, %v532
  %vm535 = vcmask 517120
  %v536 = vsel %vm535, %v534, 0.0
  %537 = vadd.xlane.f32.xlu0 %v536
  %v538 = vpop.xlane.xlu0 %537
  %v539 = vld [vmem:[#allocation4] sm:$0x1]
  %v541 = vlaneseq
  %v542 = vshrl.u32 %v541, 7
  %v543 = vsub.s32 0, %v542
  %v544 = vrot.slane %v539, %v543
  %v546 = vadd.f32 %v538, %v544
  %vm547 = vcmask 1024
  %548 = vst.msk [vmem:[%s16] sm:$0x3] %vm547, %v546
  // Predicated region
  $region66: #{three_inputs_net.1} parent=0 // pred_check
    _
  $region67: #{three_inputs_net.1} parent=0 // pred_check_branch
    %550 = sbr.rel (0) target = $region69
  $region68: #{three_inputs_net.1} parent=0 // pred_region
    _
  $region69: #{three_inputs_net.1} parent=0 // pred_fallthru
    _
  // Predicated region
  $region70: #{three_inputs_net.1} parent=0 // pred_check
    _
  $region71: #{three_inputs_net.1} parent=0 // pred_check_branch
    %552 = sbr.rel (0) target = $region73
  $region72: #{three_inputs_net.1} parent=0 // pred_region
    _
  $region73: #{three_inputs_net.1} parent=0 // pred_fallthru
    _

</llo_original>
